<compile_context>
chip_gen: v7x
topology: tpu7x:2x2x1
jax: 0.10.0
libtpu: 0.0.40
codegen_flags: <defaults>
</compile_context>

<pallas_src>
import jax
import jax.numpy as jnp
from jax.experimental import pallas as pl
from jax.experimental.pallas import tpu as pltpu


def _round_up(a, b):
    return (a + b - 1) // b * b


def _vmem_limit_bytes():
    """Generation-aware VMEM limit: ~3/4 of physical, capped at 96 MiB.
    Conservative fallback assumes v7x (64 MiB physical)."""
    cap = 64 << 20
    try:
        cap = int(pltpu.get_tpu_info().vmem_capacity_bytes)
    except Exception:
        pass
    return int(min(cap * 3 // 4, 96 << 20))


def _choose_lane_tile(hw, cin, cout, in_item, out_item, budget, *, with_out, cap):
    """Largest lane tile (multiple of 128) whose double-buffered resident
    blocks — including the (Cout, Cin) weight double-buffer — fit `budget`."""
    if hw <= 128:
        return int(hw)                       # single block == full lane extent
    cap = max(128, (int(cap) // 128) * 128)
    fixed = 2 * cout * cin * 4 + (256 << 10)          # weight double-buffer + slack
    avail = max(budget - fixed, 256 << 10)
    per_lane = 2 * cin * in_item + (2 * cout * out_item if with_out else 0)
    tl = (avail // per_lane) // 128 * 128
    tl = min(tl, cap, (hw // 128) * 128)              # never exceed the array extent
    return int(max(128, tl))


def conv_block_forward(x, w, b, gamma, beta, *, eps=4e-5, compute_dtype=None,
                       fuse=None, max_tile_stats=4096, max_tile_apply=2048):
    """x: (N, Cin, H, W); w: (Cout, Cin, 1, 1); b/gamma/beta: (Cout,).

    Note: the conv bias b cancels exactly against the train-mode BN mean
    subtraction, so it does not affect the output (accepted for API fidelity).
    eps default 4e-5 matches the module's nn.BatchNorm2d(..., eps=4e-05).
    """
    N, Cin, H, W = x.shape
    Cout = w.shape[0]
    assert w.shape[2] == 1 and w.shape[3] == 1, "only 1x1 conv implemented"
    HW = H * W
    M = N * HW

    cdt = jnp.dtype(compute_dtype) if compute_dtype is not None else jnp.dtype(x.dtype)
    out_dtype = x.dtype
    in_item = cdt.itemsize
    out_item = jnp.dtype(out_dtype).itemsize

    vlim = _vmem_limit_bytes()
    budget = vlim // 2

    x3 = x.reshape(N, Cin, HW)                       # metadata-only reshape
    if x3.dtype != cdt:
        x3 = x3.astype(cdt)
    w2 = w.reshape(Cout, Cin).astype(jnp.float32)
    g1 = gamma.astype(jnp.float32)
    b1 = beta.astype(jnp.float32)

    # ------------------------------------------------------------------ fused
    x_bytes = N * Cin * HW * in_item
    o_bytes = N * Cout * HW * out_item
    y_bytes = N * Cout * HW * 4
    fused_need = 2 * x_bytes + 2 * o_bytes + y_bytes + 2 * Cout * Cin * 4 + (1 << 20)
    if fuse is None:
        fuse = (fused_need <= budget) and (N <= 8)

    if fuse:
        def fused_kernel(x_ref, w_ref, g_ref, be_ref, o_ref):
            wm = w_ref[...]
            ys = [jnp.dot(wm, x_ref[i], preferred_element_type=jnp.float32)
                  for i in range(N)]                                   # (Cout, HW) each
            s = ys[0].sum(axis=1, keepdims=True)
            for y in ys[1:]:
                s = s + y.sum(axis=1, keepdims=True)
            mean = s * (1.0 / M)
            ss = ((ys[0] - mean) ** 2).sum(axis=1, keepdims=True)      # two-pass variance
            for y in ys[1:]:
                ss = ss + ((y - mean) ** 2).sum(axis=1, keepdims=True)
            var = ss * (1.0 / M)
            scale = g_ref[...] * jax.lax.rsqrt(var + eps)
            shift = be_ref[...] - mean * scale
            for i in range(N):
                o_ref[i] = jnp.maximum(ys[i] * scale + shift, 0.0).astype(o_ref.dtype)

        out = pl.pallas_call(
            fused_kernel,
            out_shape=jax.ShapeDtypeStruct((N, Cout, HW), out_dtype),
            grid_spec=pltpu.PrefetchScalarGridSpec(
                num_scalar_prefetch=0,
                grid=(1,),
                in_specs=[
                    pl.BlockSpec((N, Cin, HW), lambda i: (0, 0, 0)),
                    pl.BlockSpec((Cout, Cin), lambda i: (0, 0)),
                    pl.BlockSpec((Cout, 1), lambda i: (0, 0)),
                    pl.BlockSpec((Cout, 1), lambda i: (0, 0)),
                ],
                out_specs=pl.BlockSpec((N, Cout, HW), lambda i: (0, 0, 0)),
            ),
            compiler_params=pltpu.CompilerParams(
                dimension_semantics=("arbitrary",), vmem_limit_bytes=vlim),
        )(x3, w2.astype(cdt), g1.reshape(Cout, 1), b1.reshape(Cout, 1))
        return out.reshape(N, Cout, H, W)

    # ---------------------------------------------------------------- pass 1
    # Per-channel (sum, sum_of_squares) of Wx, accumulated into VMEM-resident
    # output blocks; ragged lane tail masked in-kernel.
    tl1 = _choose_lane_tile(HW, Cin, Cout, in_item, 4, budget,
                            with_out=False, cap=max_tile_stats)
    T1 = pl.cdiv(HW, tl1)
    TO = 1
    if N == 1:                                       # give v7x's 2nd core work
        for cand in (8, 4, 2):
            if T1 % cand == 0:
                TO = cand
                break
    TI = T1 // TO

    def stats_kernel(x_ref, w_ref, psum_ref, pssq_ref):
        to = pl.program_id(1)
        ti = pl.program_id(2)

        @pl.when(ti == 0)
        def _():
            psum_ref[...] = jnp.zeros_like(psum_ref)
            pssq_ref[...] = jnp.zeros_like(pssq_ref)

        y = jnp.dot(w_ref[...], x_ref[0], preferred_element_type=jnp.float32)  # (Cout, tl1)
        if HW % tl1 != 0:                            # static: only when ragged
            lane = jax.lax.broadcasted_iota(jnp.int32, y.shape, 1) + (to * TI + ti) * tl1
            y = jnp.where(lane < HW, y, 0.0)
        # TODO(synk): E[y^2]-E[y]^2 can cancel for |mean| >> std; a pilot-mean /
        # Welford combine would be more robust (fine for typical conv outputs).
        psum_ref[0, 0] += jnp.sum(y, axis=1, keepdims=True)
        pssq_ref[0, 0] += jnp.sum(y * y, axis=1, keepdims=True)

    psum, pssq = pl.pallas_call(
        stats_kernel,
        out_shape=(
            jax.ShapeDtypeStruct((N, TO, Cout, 1), jnp.float32),
            jax.ShapeDtypeStruct((N, TO, Cout, 1), jnp.float32),
        ),
        grid_spec=pltpu.PrefetchScalarGridSpec(
            num_scalar_prefetch=0,
            grid=(N, TO, TI),
            in_specs=[
                pl.BlockSpec((1, Cin, tl1), lambda n, to, ti: (n, 0, to * TI + ti)),
                pl.BlockSpec((Cout, Cin), lambda n, to, ti: (0, 0)),
            ],
            out_specs=(
                pl.BlockSpec((1, 1, Cout, 1), lambda n, to, ti: (n, to, 0, 0)),
                pl.BlockSpec((1, 1, Cout, 1), lambda n, to, ti: (n, to, 0, 0)),
            ),
        ),
        compiler_params=pltpu.CompilerParams(
            dimension_semantics=("parallel", "parallel", "arbitrary"),
            vmem_limit_bytes=vlim),
    )(x3, w2.astype(cdt))

    # ---- Tiny scalar epilogue: fold BN into the weights + a shift vector.
    s = jnp.sum(psum, axis=(0, 1)).reshape(Cout)
    ss = jnp.sum(pssq, axis=(0, 1)).reshape(Cout)
    mean = s / M
    var = jnp.maximum(ss / M - mean * mean, 0.0)
    inv = jax.lax.rsqrt(var + eps)
    scale = g1 * inv
    shift = (b1 - mean * scale).reshape(Cout, 1)
    ws = (w2 * scale[:, None]).astype(cdt)           # BN scale folded into weights

    # ---------------------------------------------------------------- pass 2
    tl2 = _choose_lane_tile(HW, Cin, Cout, in_item, out_item, budget,
                            with_out=True, cap=max_tile_apply)
    T2 = pl.cdiv(HW, tl2)

    def apply_kernel(x_ref, ws_ref, sh_ref, o_ref):
        y = jnp.dot(ws_ref[...], x_ref[0], preferred_element_type=jnp.float32)
        o_ref[0] = jnp.maximum(y + sh_ref[...], 0.0).astype(o_ref.dtype)

    out = pl.pallas_call(
        apply_kernel,
        out_shape=jax.ShapeDtypeStruct((N, Cout, HW), out_dtype),
        grid_spec=pltpu.PrefetchScalarGridSpec(
            num_scalar_prefetch=0,
            grid=(N, T2),
            in_specs=[
                pl.BlockSpec((1, Cin, tl2), lambda n, t: (n, 0, t)),
                pl.BlockSpec((Cout, Cin), lambda n, t: (0, 0)),
                pl.BlockSpec((Cout, 1), lambda n, t: (0, 0)),
            ],
            out_specs=pl.BlockSpec((1, Cout, tl2), lambda n, t: (n, 0, t)),
        ),
        compiler_params=pltpu.CompilerParams(
            dimension_semantics=("parallel", "parallel"),
            vmem_limit_bytes=vlim),
    )(x3, ws, shift)

    return out.reshape(N, Cout, H, W)


def _reference_forward(x, w, b, gamma, beta, eps=4e-5):
    """Pure-JAX reference mirroring PyTorch ConvBlock.forward (train-mode BN)."""
    Cout, Cin = w.shape[0], w.shape[1]
    y = jnp.einsum("nchw,oc->nohw", x, w.reshape(Cout, Cin)) + b[None, :, None, None]
    mean = jnp.mean(y, axis=(0, 2, 3), keepdims=True)
    var = jnp.mean((y - mean) ** 2, axis=(0, 2, 3), keepdims=True)
    yhat = (y - mean) * jax.lax.rsqrt(var + eps)
    return jnp.maximum(yhat * gamma[None, :, None, None] + beta[None, :, None, None], 0.0)


if __name__ == "__main__":
    key = jax.random.PRNGKey(0)
    k_x, k_w, k_b, k_g, k_be, k_x2 = jax.random.split(key, 6)

    N, Cin, Cout, H, W = 2, 4, 8, 16, 16
    x = jax.random.normal(k_x, (N, Cin, H, W), dtype=jnp.float32)
    w = 0.1 * jax.random.normal(k_w, (Cout, Cin, 1, 1), dtype=jnp.float32)
    b = 0.1 * jax.random.normal(k_b, (Cout,), dtype=jnp.float32)
    gamma = 1.0 + 0.1 * jax.random.normal(k_g, (Cout,), dtype=jnp.float32)
    beta = 0.1 * jax.random.normal(k_be, (Cout,), dtype=jnp.float32)
    ref = _reference_forward(x, w, b, gamma, beta)

    # Fused single-kernel path (auto-selected for small/medium feature maps).
    out_f = jax.block_until_ready(conv_block_forward(x, w, b, gamma, beta, fuse=True))
    assert out_f.shape == (N, Cout, H, W)
    assert jnp.allclose(out_f, ref, atol=1e-4, rtol=1e-4), "fused path mismatch"

    # Two-pass (stats + apply) path on the same inputs.
    out_t = jax.block_until_ready(conv_block_forward(x, w, b, gamma, beta, fuse=False))
    assert jnp.allclose(out_t, ref, atol=1e-4, rtol=1e-4), "two-pass path mismatch"

    # Ragged H*W (not a multiple of the lane tile): exercises in-kernel tail
    # masking, Pallas partial edge blocks and the N==1 megacore tile split.
    Hr = Wr = 37
    xr = jax.random.normal(k_x2, (1, Cin, Hr, Wr), dtype=jnp.float32)
    ref_r = _reference_forward(xr, w, b, gamma, beta)
    out_r = jax.block_until_ready(
        conv_block_forward(xr, w, b, gamma, beta, fuse=False,
                           max_tile_stats=256, max_tile_apply=256))
    assert out_r.shape == (1, Cout, Hr, Wr)
    assert jnp.allclose(out_r, ref_r, atol=1e-4, rtol=1e-4), "ragged path mismatch"

    print("KERNEL_OK")
</pallas_src>

<mosaic_0001>
module attributes {stable_mosaic.version = 11 : i64} {
  func.func @fused_kernel(%arg0: i32, %arg1: memref<2x4x256xf32, #tpu.memory_space<vmem>>, %arg2: memref<8x4xf32, #tpu.memory_space<vmem>>, %arg3: memref<8x1xf32, #tpu.memory_space<vmem>>, %arg4: memref<8x1xf32, #tpu.memory_space<vmem>>, %arg5: memref<2x8x256xf32, #tpu.memory_space<vmem>>) attributes {dimension_semantics = [#tpu.dimension_semantics<arbitrary>], iteration_bounds = array<i64: 1>, scalar_prefetch = 0 : i64, scratch_operands = 0 : i64, tpu.core_type = #tpu.core_type<tc>, window_params = [{pipeline_mode = #tpu.pipeline_mode<synchronous>, transform_indices = @transform_0, window_bounds = array<i64: 2, 4, 256>}, {pipeline_mode = #tpu.pipeline_mode<synchronous>, transform_indices = @transform_1, window_bounds = array<i64: 8, 4>}, {pipeline_mode = #tpu.pipeline_mode<synchronous>, transform_indices = @transform_2, window_bounds = array<i64: 8, 1>}, {pipeline_mode = #tpu.pipeline_mode<synchronous>, transform_indices = @transform_3, window_bounds = array<i64: 8, 1>}, {pipeline_mode = #tpu.pipeline_mode<synchronous>, transform_indices = @transform_4, window_bounds = array<i64: 2, 8, 256>}]} {
    %c0 = arith.constant 0 : index
    %c0_0 = arith.constant 0 : index
    %0 = vector.load %arg2[%c0, %c0_0] : memref<8x4xf32, #tpu.memory_space<vmem>>, vector<8x4xf32>
    %c0_1 = arith.constant 0 : index
    %c0_2 = arith.constant 0 : index
    %c0_3 = arith.constant 0 : index
    %1 = vector.load %arg1[%c0_1, %c0_2, %c0_3] : memref<2x4x256xf32, #tpu.memory_space<vmem>>, vector<1x4x256xf32>
    %2 = vector.shape_cast %1 : vector<1x4x256xf32> to vector<4x256xf32>
    %cst = arith.constant dense<0.000000e+00> : vector<8x256xf32>
    %3 = tpu.matmul %0, %2, %cst {dimension_numbers = #tpu.dot_dimension_numbers<[1], [0], [0], [1], [0, 0, 1, 1], [], []>} : vector<8x4xf32>, vector<4x256xf32>, vector<8x256xf32> -> vector<8x256xf32>
    %c1 = arith.constant 1 : index
    %c0_4 = arith.constant 0 : index
    %c0_5 = arith.constant 0 : index
    %4 = vector.load %arg1[%c1, %c0_4, %c0_5] : memref<2x4x256xf32, #tpu.memory_space<vmem>>, vector<1x4x256xf32>
    %5 = vector.shape_cast %4 : vector<1x4x256xf32> to vector<4x256xf32>
    %cst_6 = arith.constant dense<0.000000e+00> : vector<8x256xf32>
    %6 = tpu.matmul %0, %5, %cst_6 {dimension_numbers = #tpu.dot_dimension_numbers<[1], [0], [0], [1], [0, 0, 1, 1], [], []>} : vector<8x4xf32>, vector<4x256xf32>, vector<8x256xf32> -> vector<8x256xf32>
    %cst_7 = arith.constant dense<0.000000e+00> : vector<8xf32>
    %7 = vector.multi_reduction <add>, %3, %cst_7 [1] : vector<8x256xf32> to vector<8xf32>
    %8 = vector.shape_cast %7 : vector<8xf32> to vector<8x1xf32>
    %cst_8 = arith.constant dense<0.000000e+00> : vector<8xf32>
    %9 = vector.multi_reduction <add>, %6, %cst_8 [1] : vector<8x256xf32> to vector<8xf32>
    %10 = vector.shape_cast %9 : vector<8xf32> to vector<8x1xf32>
    %11 = arith.addf %8, %10 : vector<8x1xf32>
    %cst_9 = arith.constant 0.001953125 : f32
    %12 = vector.broadcast %cst_9 : f32 to vector<8x1xf32>
    %13 = arith.mulf %11, %12 : vector<8x1xf32>
    %14 = vector.broadcast %13 : vector<8x1xf32> to vector<8x256xf32>
    %15 = arith.subf %3, %14 : vector<8x256xf32>
    %16 = arith.mulf %15, %15 : vector<8x256xf32>
    %cst_10 = arith.constant dense<0.000000e+00> : vector<8xf32>
    %17 = vector.multi_reduction <add>, %16, %cst_10 [1] : vector<8x256xf32> to vector<8xf32>
    %18 = vector.shape_cast %17 : vector<8xf32> to vector<8x1xf32>
    %19 = vector.broadcast %13 : vector<8x1xf32> to vector<8x256xf32>
    %20 = arith.subf %6, %19 : vector<8x256xf32>
    %21 = arith.mulf %20, %20 : vector<8x256xf32>
    %cst_11 = arith.constant dense<0.000000e+00> : vector<8xf32>
    %22 = vector.multi_reduction <add>, %21, %cst_11 [1] : vector<8x256xf32> to vector<8xf32>
    %23 = vector.shape_cast %22 : vector<8xf32> to vector<8x1xf32>
    %24 = arith.addf %18, %23 : vector<8x1xf32>
    %cst_12 = arith.constant 0.001953125 : f32
    %25 = vector.broadcast %cst_12 : f32 to vector<8x1xf32>
    %26 = arith.mulf %24, %25 : vector<8x1xf32>
    %c0_13 = arith.constant 0 : index
    %c0_14 = arith.constant 0 : index
    %27 = vector.load %arg3[%c0_13, %c0_14] : memref<8x1xf32, #tpu.memory_space<vmem>>, vector<8x1xf32>
    %cst_15 = arith.constant 4.000000e-05 : f32
    %28 = vector.broadcast %cst_15 : f32 to vector<8x1xf32>
    %29 = arith.addf %26, %28 : vector<8x1xf32>
    %30 = math.rsqrt %29 : vector<8x1xf32>
    %31 = arith.mulf %27, %30 : vector<8x1xf32>
    %c0_16 = arith.constant 0 : index
    %c0_17 = arith.constant 0 : index
    %32 = vector.load %arg4[%c0_16, %c0_17] : memref<8x1xf32, #tpu.memory_space<vmem>>, vector<8x1xf32>
    %33 = arith.mulf %13, %31 : vector<8x1xf32>
    %34 = arith.subf %32, %33 : vector<8x1xf32>
    %35 = vector.broadcast %31 : vector<8x1xf32> to vector<8x256xf32>
    %36 = arith.mulf %3, %35 : vector<8x256xf32>
    %37 = vector.broadcast %34 : vector<8x1xf32> to vector<8x256xf32>
    %38 = arith.addf %36, %37 : vector<8x256xf32>
    %cst_18 = arith.constant 0.000000e+00 : f32
    %39 = vector.broadcast %cst_18 : f32 to vector<8x256xf32>
    %40 = arith.maximumf %38, %39 : vector<8x256xf32>
    %c0_19 = arith.constant 0 : index
    %c0_20 = arith.constant 0 : index
    %c0_21 = arith.constant 0 : index
    %41 = vector.load %arg5[%c0_19, %c0_20, %c0_21] : memref<2x8x256xf32, #tpu.memory_space<vmem>>, vector<1x8x256xf32>
    %42 = vector.shape_cast %41 : vector<1x8x256xf32> to vector<8x256xf32>
    %43 = vector.shape_cast %40 : vector<8x256xf32> to vector<1x8x256xf32>
    tpu.vector_store %arg5[%c0_19, %c0_20, %c0_21], %43 {strides = array<i32>} : memref<2x8x256xf32, #tpu.memory_space<vmem>>, vector<1x8x256xf32>,
    %44 = vector.broadcast %31 : vector<8x1xf32> to vector<8x256xf32>
    %45 = arith.mulf %6, %44 : vector<8x256xf32>
    %46 = vector.broadcast %34 : vector<8x1xf32> to vector<8x256xf32>
    %47 = arith.addf %45, %46 : vector<8x256xf32>
    %cst_22 = arith.constant 0.000000e+00 : f32
    %48 = vector.broadcast %cst_22 : f32 to vector<8x256xf32>
    %49 = arith.maximumf %47, %48 : vector<8x256xf32>
    %c1_23 = arith.constant 1 : index
    %c0_24 = arith.constant 0 : index
    %c0_25 = arith.constant 0 : index
    %50 = vector.load %arg5[%c1_23, %c0_24, %c0_25] : memref<2x8x256xf32, #tpu.memory_space<vmem>>, vector<1x8x256xf32>
    %51 = vector.shape_cast %50 : vector<1x8x256xf32> to vector<8x256xf32>
    %52 = vector.shape_cast %49 : vector<8x256xf32> to vector<1x8x256xf32>
    tpu.vector_store %arg5[%c1_23, %c0_24, %c0_25], %52 {strides = array<i32>} : memref<2x8x256xf32, #tpu.memory_space<vmem>>, vector<1x8x256xf32>,
    return
  }
  func.func @transform_0(%arg0: i32) -> (i32, i32, i32) {
    %c0_i32 = arith.constant 0 : i32
    %c0_i32_0 = arith.constant 0 : i32
    %c0_i32_1 = arith.constant 0 : i32
    %c0_i32_2 = arith.constant 0 : i32
    return %c0_i32, %c0_i32_0, %c0_i32_1 : i32, i32, i32
  }
  func.func @transform_1(%arg0: i32) -> (i32, i32) {
    %c0_i32 = arith.constant 0 : i32
    %c0_i32_0 = arith.constant 0 : i32
    %c0_i32_1 = arith.constant 0 : i32
    return %c0_i32, %c0_i32_0 : i32, i32
  }
  func.func @transform_2(%arg0: i32) -> (i32, i32) {
    %c0_i32 = arith.constant 0 : i32
    %c0_i32_0 = arith.constant 0 : i32
    %c0_i32_1 = arith.constant 0 : i32
    return %c0_i32, %c0_i32_0 : i32, i32
  }
  func.func @transform_3(%arg0: i32) -> (i32, i32) {
    %c0_i32 = arith.constant 0 : i32
    %c0_i32_0 = arith.constant 0 : i32
    %c0_i32_1 = arith.constant 0 : i32
    return %c0_i32, %c0_i32_0 : i32, i32
  }
  func.func @transform_4(%arg0: i32) -> (i32, i32, i32) {
    %c0_i32 = arith.constant 0 : i32
    %c0_i32_0 = arith.constant 0 : i32
    %c0_i32_1 = arith.constant 0 : i32
    %c0_i32_2 = arith.constant 0 : i32
    return %c0_i32, %c0_i32_0, %c0_i32_1 : i32, i32, i32
  }
}

</mosaic_0001>

<llo_original>
// kernel: tpu_custom_call.1
$region0: #{tpu_custom_call.1}
  #allocation0 [shape = 'u32[]', space=smem, size = 0x4, offset = 0x4, fixed_abs, tag = 'smem constant byte address 0x4 - core index']
  #allocation1 [shape = 'u32[144,128]{1,0:T(1,128)}', space=vmem, size = 0x12000, scoped, tag = 'internal scratch']
  %s0 = inlined_call_operand.vmem [shape: f32[2,4,256], index: 0, kind: input, shape index: {}]
  %s1 = inlined_call_operand.vmem [shape: f32[8,4], index: 1, kind: input, shape index: {}]
  %s2 = inlined_call_operand.vmem [shape: f32[8,1], index: 2, kind: input, shape index: {}]
  %s3 = inlined_call_operand.vmem [shape: f32[8,1], index: 3, kind: input, shape index: {}]
  %s4 = inlined_call_operand.hbm [shape: f32[2,8,256], index: 4, kind: output, shape index: {}]
  %s5 = sld [smem:[#allocation0]]
  $region26: #{tpu_custom_call.1} parent=0
    _
  %s7 = ssub.s32 1, %s5
  %s8 = scalar_select 0, %s7, %s5
  $region1: #{tpu_custom_call.1} parent=0
    #allocation2 [shape = 'u8[16384]{0}', space=vmem, size = 0x4000, scoped, tag = 'output window, operand 0, single buffered']
    #allocation3 [shape = 's32[1]{0}', space=sflag, size = 0x4, scoped, tag = 'scoped memory for tpu_custom_call.1']
    %9 = vsyncpa [#allocation3], 0
    // Predicated region
    $region2: #{tpu_custom_call.1} parent=1 // pred_check
      _
    $region3: #{tpu_custom_call.1} parent=1 // pred_check_branch
      %11 = sbr.rel (0) target = $region5
    $region4: #{tpu_custom_call.1} parent=1 // pred_region
      _
    $region5: #{tpu_custom_call.1} parent=1 // pred_fallthru
      _
    // Predicated region
    $region6: #{tpu_custom_call.1} parent=1 // pred_check
      _
    $region7: #{tpu_custom_call.1} parent=1 // pred_check_branch
      %13 = sbr.rel (0) target = $region9
    $region8: #{tpu_custom_call.1} parent=1 // pred_region
      _
    $region9: #{tpu_custom_call.1} parent=1 // pred_fallthru
      _
    // Predicated region
    $region10: #{tpu_custom_call.1} parent=1 // pred_check
      _
    $region11: #{tpu_custom_call.1} parent=1 // pred_check_branch
      %15 = sbr.rel (0) target = $region13
    $region12: #{tpu_custom_call.1} parent=1 // pred_region
      _
    $region13: #{tpu_custom_call.1} parent=1 // pred_fallthru
      _
    // Predicated region
    $region14: #{tpu_custom_call.1} parent=1 // pred_check
      _
    $region15: #{tpu_custom_call.1} parent=1 // pred_check_branch
      %17 = sbr.rel (0) target = $region17
    $region16: #{tpu_custom_call.1} parent=1 // pred_region
      _
    $region17: #{tpu_custom_call.1} parent=1 // pred_fallthru
      _
    %v18 = vld [vmem:[%s1] sm:$0xff]
    %v19 = vld [vmem:[%s0] sm:$0xff]
    %v21 = vcombine.high %v19, %v19
    %vm22 = vcmask 31744
    %v24 = vsel %vm22, %v18, 0
    %vm26 = vcmask 1043456
    %v27 = vsel %vm26, %v19, 0
    %v29 = vsel %vm26, %v21, 0
    %31 = vmatprep.subr.mxu0 %v29
    %32 = vmatpush1.msra.mxu0 %v27
    %33 = vmatprep.subr.mxu0 0.0
    %34 = vmatpush1.msra.mxu0 0.0
    %35 = vmatprep.subr.mxu0 0.0
    %36 = vmatpush1.msra.mxu0 0.0
    %37 = vmatprep.subr.mxu0 0.0
    %38 = vmatpush1.msra.mxu0 0.0
    %39 = vmatprep.subr.mxu0 0.0
    %40 = vmatpush1.msra.mxu0 0.0
    %41 = vmatprep.subr.mxu0 0.0
    %42 = vmatpush1.msra.mxu0 0.0
    %43 = vmatprep.subr.mxu0 0.0
    %44 = vmatpush1.msra.mxu0 0.0
    %45 = vmatprep.subr.mxu0 0.0
    %46 = vmatpush1.msra.mxu0 0.0
    %47 = vmatprep.subr.mxu0 0.0
    %48 = vmatpush1.msra.mxu0 0.0
    %49 = vmatprep.subr.mxu0 0.0
    %50 = vmatpush1.msra.mxu0 0.0
    %51 = vmatprep.subr.mxu0 0.0
    %52 = vmatpush1.msra.mxu0 0.0
    %53 = vmatprep.subr.mxu0 0.0
    %54 = vmatpush1.msra.mxu0 0.0
    %55 = vmatprep.subr.mxu0 0.0
    %56 = vmatpush1.msra.mxu0 0.0
    %57 = vmatprep.subr.mxu0 0.0
    %58 = vmatpush1.msra.mxu0 0.0
    %59 = vmatprep.subr.mxu0 0.0
    %60 = vmatpush1.msra.mxu0 0.0
    %61 = vmatprep.subr.mxu0 0.0
    %62 = vmatpush1.msra.mxu0 0.0
    %63 = vmatprep.subr.mxu0 0.0
    %64 = vmatpush1.msra.mxu0 0.0
    %65 = vmatprep.subr.mxu0 0.0
    %66 = vmatpush1.msra.mxu0 0.0
    %67 = vmatprep.subr.mxu0 0.0
    %68 = vmatpush1.msra.mxu0 0.0
    %69 = vmatprep.subr.mxu0 0.0
    %70 = vmatpush1.msra.mxu0 0.0
    %71 = vmatprep.subr.mxu0 0.0
    %72 = vmatpush1.msra.mxu0 0.0
    %73 = vmatprep.subr.mxu0 0.0
    %74 = vmatpush1.msra.mxu0 0.0
    %75 = vmatprep.subr.mxu0 0.0
    %76 = vmatpush1.msra.mxu0 0.0
    %77 = vmatprep.subr.mxu0 0.0
    %78 = vmatpush1.msra.mxu0 0.0
    %79 = vmatprep.subr.mxu0 0.0
    %80 = vmatpush1.msra.mxu0 0.0
    %81 = vmatprep.subr.mxu0 0.0
    %82 = vmatpush1.msra.mxu0 0.0
    %83 = vmatprep.subr.mxu0 0.0
    %84 = vmatpush1.msra.mxu0 0.0
    %85 = vmatprep.subr.mxu0 0.0
    %86 = vmatpush1.msra.mxu0 0.0
    %87 = vmatprep.subr.mxu0 0.0
    %88 = vmatpush1.msra.mxu0 0.0
    %89 = vmatprep.subr.mxu0 0.0
    %90 = vmatpush1.msra.mxu0 0.0
    %91 = vmatprep.subr.mxu0 0.0
    %92 = vmatpush1.msra.mxu0 0.0
    %93 = vmatprep.subr.mxu0 0.0
    %94 = vmatpush1.msra.mxu0 0.0
    %95 = vmatprep.mubr.f32.mxu0 0.0
    %96 = vmatmul.mubr.f32.gmra.mrb[0].mxu0 %v24
    %v97 = vpop.f32.mrb[0].mxu0
    %v98 = vadd.f32 0.0, %v97
    %v99 = vpop.f32.mrb[0].mxu0
    %v100 = vadd.f32 0.0, %v99
    %101 = vdwg.mxu0
    %s102 = scalar_lea.vmem %s0, 8
    %v103 = vld [vmem:[%s102] sm:$0xff]
    %v105 = vcombine.high %v103, %v103
    %v106 = vsel %vm26, %v103, 0
    %v108 = vsel %vm26, %v105, 0
    %110 = vmatprep.subr.mxu0 %v108
    %111 = vmatpush1.msra.mxu0 %v106
    %112 = vmatprep.subr.mxu0 0.0
    %113 = vmatpush1.msra.mxu0 0.0
    %114 = vmatprep.subr.mxu0 0.0
    %115 = vmatpush1.msra.mxu0 0.0
    %116 = vmatprep.subr.mxu0 0.0
    %117 = vmatpush1.msra.mxu0 0.0
    %118 = vmatprep.subr.mxu0 0.0
    %119 = vmatpush1.msra.mxu0 0.0
    %120 = vmatprep.subr.mxu0 0.0
    %121 = vmatpush1.msra.mxu0 0.0
    %122 = vmatprep.subr.mxu0 0.0
    %123 = vmatpush1.msra.mxu0 0.0
    %124 = vmatprep.subr.mxu0 0.0
    %125 = vmatpush1.msra.mxu0 0.0
    %126 = vmatprep.subr.mxu0 0.0
    %127 = vmatpush1.msra.mxu0 0.0
    %128 = vmatprep.subr.mxu0 0.0
    %129 = vmatpush1.msra.mxu0 0.0
    %130 = vmatprep.subr.mxu0 0.0
    %131 = vmatpush1.msra.mxu0 0.0
    %132 = vmatprep.subr.mxu0 0.0
    %133 = vmatpush1.msra.mxu0 0.0
    %134 = vmatprep.subr.mxu0 0.0
    %135 = vmatpush1.msra.mxu0 0.0
    %136 = vmatprep.subr.mxu0 0.0
    %137 = vmatpush1.msra.mxu0 0.0
    %138 = vmatprep.subr.mxu0 0.0
    %139 = vmatpush1.msra.mxu0 0.0
    %140 = vmatprep.subr.mxu0 0.0
    %141 = vmatpush1.msra.mxu0 0.0
    %142 = vmatprep.subr.mxu0 0.0
    %143 = vmatpush1.msra.mxu0 0.0
    %144 = vmatprep.subr.mxu0 0.0
    %145 = vmatpush1.msra.mxu0 0.0
    %146 = vmatprep.subr.mxu0 0.0
    %147 = vmatpush1.msra.mxu0 0.0
    %148 = vmatprep.subr.mxu0 0.0
    %149 = vmatpush1.msra.mxu0 0.0
    %150 = vmatprep.subr.mxu0 0.0
    %151 = vmatpush1.msra.mxu0 0.0
    %152 = vmatprep.subr.mxu0 0.0
    %153 = vmatpush1.msra.mxu0 0.0
    %154 = vmatprep.subr.mxu0 0.0
    %155 = vmatpush1.msra.mxu0 0.0
    %156 = vmatprep.subr.mxu0 0.0
    %157 = vmatpush1.msra.mxu0 0.0
    %158 = vmatprep.subr.mxu0 0.0
    %159 = vmatpush1.msra.mxu0 0.0
    %160 = vmatprep.subr.mxu0 0.0
    %161 = vmatpush1.msra.mxu0 0.0
    %162 = vmatprep.subr.mxu0 0.0
    %163 = vmatpush1.msra.mxu0 0.0
    %164 = vmatprep.subr.mxu0 0.0
    %165 = vmatpush1.msra.mxu0 0.0
    %166 = vmatprep.subr.mxu0 0.0
    %167 = vmatpush1.msra.mxu0 0.0
    %168 = vmatprep.subr.mxu0 0.0
    %169 = vmatpush1.msra.mxu0 0.0
    %170 = vmatprep.subr.mxu0 0.0
    %171 = vmatpush1.msra.mxu0 0.0
    %172 = vmatprep.subr.mxu0 0.0
    %173 = vmatpush1.msra.mxu0 0.0
    %174 = vmatprep.mubr.f32.mxu0 0.0
    %175 = vmatmul.mubr.f32.gmra.mrb[0].mxu0 %v24
    %v176 = vpop.f32.mrb[0].mxu0
    %v177 = vadd.f32 0.0, %v176
    %v178 = vpop.f32.mrb[0].mxu0
    %v179 = vadd.f32 0.0, %v178
    %180 = vdwg.mxu0
    %v181 = vadd.f32 %v98, %v100
    %182 = vadd.xlane.f32.xlu0 %v181
    %v183 = vpop.xlane.xlu0 %182
    %v184 = vadd.f32 %v177, %v179
    %185 = vadd.xlane.f32.xlu0 %v184
    %v186 = vpop.xlane.xlu0 %185
    %v187 = vadd.f32 %v183, %v186
    %v188 = vmul.f32 %v187, 0.001953125
    %v189 = vsub.f32 %v98, %v188
    %v190 = vsub.f32 %v100, %v188
    %v191 = vmul.f32 %v189, %v189
    %v192 = vmul.f32 %v190, %v190
    %v193 = vadd.f32 %v191, %v192
    %194 = vadd.xlane.f32.xlu0 %v193
    %v195 = vpop.xlane.xlu0 %194
    %v196 = vsub.f32 %v177, %v188
    %v197 = vsub.f32 %v179, %v188
    %v198 = vmul.f32 %v196, %v196
    %v199 = vmul.f32 %v197, %v197
    %v200 = vadd.f32 %v198, %v199
    %201 = vadd.xlane.f32.xlu0 %v200
    %v202 = vpop.xlane.xlu0 %201
    %v203 = vadd.f32 %v195, %v202
    %v204 = vmul.f32 %v203, 0.001953125
    %v205 = vld [vmem:[%s2] sm:$0xff]
    %v206 = vadd.f32 %v204, 4e-05
    %v207 = vrsqrt.pop %v206
    %v208 = vmul.f32 %v205, %v207
    %v209 = vld [vmem:[%s3] sm:$0xff]
    %v210 = vmul.f32 %v188, %v208
    %v211 = vsub.f32 %v209, %v210
    %213 = vset.pattern.permute.xlu0 0
    %214 = vperm.xlu0 %213, %v208
    %v215 = vpop.permute.xlu0 %214
    %v217 = vmul.f32 %v98, %v215
    %v218 = vmul.f32 %v100, %v215
    %220 = vset.pattern.permute.xlu0 0
    %221 = vperm.xlu0 %220, %v211
    %v222 = vpop.permute.xlu0 %221
    %v224 = vadd.f32 %v217, %v222
    %v225 = vadd.f32 %v218, %v222
    %v226 = vmax.f32 %v224, 0.0
    %v227 = vmax.f32 %v225, 0.0
    %228 = vst [vmem:[#allocation2] sm:$0xff] %v226
    %229 = vst [vmem:[#allocation2 + $0x8] sm:$0xff] %v227
    %v230 = vmul.f32 %v177, %v215
    %v231 = vmul.f32 %v179, %v215
    %v232 = vadd.f32 %v230, %v222
    %v233 = vadd.f32 %v231, %v222
    %v234 = vmax.f32 %v232, 0.0
    %v235 = vmax.f32 %v233, 0.0
    %s236 = scalar_lea.vmem [#allocation2], 16
    %237 = vst [vmem:[%s236] sm:$0xff] %v234
    %238 = vst [vmem:[%s236 + $0x8] sm:$0xff] %v235
    // Predicated region
    $region18: #{tpu_custom_call.1} parent=1 // pred_check
      _
    $region19: #{tpu_custom_call.1} parent=1 // pred_check_branch
      %240 = sbr.rel (0) target = $region21
    $region20: #{tpu_custom_call.1} parent=1 // pred_region
      %s242 = ssub.s32 512, 512
      %243 = vsyncadd [#allocation3], %s242
      %s244 = sshll.u32 [#allocation2], 4
      %s245 = int_to_ptr.vmem [resolvable:$true] %s244
      %250 = dma.vmem_to_hbm [thread:$0]  %s245, 512, %s4, [#allocation3], 256, 256, 16
    $region21: #{tpu_custom_call.1} parent=1 // pred_fallthru
      _
    // Predicated region
    $region22: #{tpu_custom_call.1} parent=1 // pred_check
      _
    $region23: #{tpu_custom_call.1} parent=1 // pred_check_branch
      %252 = sbr.rel (0) target = $region25
    $region24: #{tpu_custom_call.1} parent=1 // pred_region
      %253 = dma.done [#allocation3], 512
    $region25: #{tpu_custom_call.1} parent=1 // pred_fallthru
      _
    %254 = vsyncpa [#allocation3], 1

</llo_original>
